<compile_context>
chip_gen: v6e
topology: v6e:2x2x1
jax: 0.10.0
libtpu: 0.0.40
codegen_flags: <defaults>
</compile_context>

<pallas_src>
import functools

import jax
import jax.numpy as jnp
from jax.experimental import pallas as pl
from jax.experimental.pallas import tpu as pltpu

FEAT_DIM = 2048   # flatten(backbone output) size, fixed by nn.Linear(2048, num_class)
LANE = 128        # TPU lane width; pad the class dim up to this
SUBLANE = 8       # f32 sublane count; pad the batch dim up to this


def _fc_kernel(x_ref, w_ref, b_ref, o_ref):
    """Single-step FC: out[Bp, Np] = feat[Bp, K] @ W[K, Np] + bias[1, Np].

    feat arrives as f32 and is cast to bf16 in-kernel (VPU op, hidden under the
    MXU/DMA); the MXU accumulates in f32 and the bias add stays in f32.
    """
    x_bf = x_ref[...].astype(jnp.bfloat16)
    o_ref[...] = (
        jnp.dot(x_bf, w_ref[...], preferred_element_type=jnp.float32)
        + b_ref[...]
    ).astype(o_ref.dtype)


def prepare_fc_params(w_t, bias):
    """One-time (init-time) param prep: pad class dim to 128 lanes, cast W to bf16.

    w_t  : (2048, num_class)  -- PyTorch fc.weight transposed
    bias : (num_class,)
    Returns (w_pad bf16 (2048, n_pad), b_pad f32 (1, n_pad)).
    """
    assert w_t.shape[0] == FEAT_DIM
    num_class = w_t.shape[1]
    n_pad = ((num_class + LANE - 1) // LANE) * LANE
    w_pad = jnp.pad(w_t.astype(jnp.bfloat16), ((0, 0), (0, n_pad - num_class)))
    b_pad = jnp.pad(bias.astype(jnp.float32), (0, n_pad - num_class)).reshape(1, n_pad)
    return w_pad, b_pad


@functools.partial(jax.jit, static_argnames=("num_class",))
def net_forward(x, w_pad, b_pad, *, num_class):
    """Forward pass of Net (flatten + Linear) given pre-padded bf16 weights.

    x     : (B, C, H, W) backbone features with C*H*W == 2048 (NCHW, like PyTorch)
    w_pad : (2048, n_pad) bfloat16   (from prepare_fc_params)
    b_pad : (1, n_pad) float32       (from prepare_fc_params)
    returns (B, num_class) float32
    """
    B = x.shape[0]
    feat = x.reshape(B, -1).astype(jnp.float32)     # torch.flatten(x, start_dim=1)
    assert feat.shape[1] == FEAT_DIM
    n_pad = w_pad.shape[1]

    # Pad the batch dim to a full 8-row sublane tile so stores are unmasked.
    b_rows = ((B + SUBLANE - 1) // SUBLANE) * SUBLANE
    feat_p = jnp.pad(feat, ((0, b_rows - B), (0, 0)))

    cost = pl.CostEstimate(
        flops=2 * b_rows * FEAT_DIM * n_pad,
        bytes_accessed=(feat_p.size * 4 + w_pad.size * 2
                        + b_pad.size * 4 + b_rows * n_pad * 4),
        transcendentals=0,
    )

    out_padded = pl.pallas_call(
        _fc_kernel,
        out_shape=jax.ShapeDtypeStruct((b_rows, n_pad), jnp.float32),
        in_specs=[
            pl.BlockSpec(memory_space=pltpu.MemorySpace.VMEM),  # features (b_rows, 2048) f32
            pl.BlockSpec(memory_space=pltpu.MemorySpace.VMEM),  # weight   (2048, n_pad) bf16
            pl.BlockSpec(memory_space=pltpu.MemorySpace.VMEM),  # bias     (1, n_pad) f32
        ],
        out_specs=pl.BlockSpec(memory_space=pltpu.MemorySpace.VMEM),
        cost_estimate=cost,
    )(feat_p, w_pad, b_pad)

    # Padded weight/bias columns are zero and padded rows are discarded here.
    return out_padded[:B, :num_class]


if __name__ == "__main__":
    B = 2
    NUM_CLASS = 10
    # Backbone output shaped like a ResNet-style feature map: (B, 2048, 1, 1)
    C, H, W = 2048, 1, 1

    key = jax.random.PRNGKey(0)
    kx, kw, kb = jax.random.split(key, 3)

    x = jax.random.normal(kx, (B, C, H, W), dtype=jnp.float32)
    # Deterministic Linear(2048, num_class) params (PyTorch weight is (C_out, C_in));
    # built already transposed to (C_in, C_out).
    w_t = jax.random.normal(kw, (FEAT_DIM, NUM_CLASS), dtype=jnp.float32) * 0.02
    bias = jax.random.normal(kb, (NUM_CLASS,), dtype=jnp.float32) * 0.02

    # One-time parameter prep (done once, outside the per-call path).
    w_pad, b_pad = prepare_fc_params(w_t, bias)
    w_pad, b_pad = jax.block_until_ready((w_pad, b_pad))

    out = net_forward(x, w_pad, b_pad, num_class=NUM_CLASS)
    jax.block_until_ready(out)
    assert out.shape == (B, NUM_CLASS)

    # Cross-check against a plain-JAX reference with the same bf16 casts
    # (accumulation in f32 in both paths).
    feat_bf = x.reshape(B, -1).astype(jnp.bfloat16).astype(jnp.float32)
    w_bf = w_t.astype(jnp.bfloat16).astype(jnp.float32)
    ref = feat_bf @ w_bf + bias[None, :]
    assert jnp.allclose(out, ref, atol=2e-3, rtol=2e-3)

    # Loose check against the full-f32 reference (bf16 cast error only).
    ref_f32 = x.reshape(B, -1) @ w_t + bias[None, :]
    assert jnp.allclose(out, ref_f32, atol=3e-2, rtol=3e-2)

    print("KERNEL_OK")
</pallas_src>

<mosaic_0001>
module attributes {stable_mosaic.version = 11 : i64} {
  func.func @_fc_kernel(%arg0: memref<8x2048xf32, #tpu.memory_space<vmem>>, %arg1: memref<2048x128xbf16, #tpu.memory_space<vmem>>, %arg2: memref<1x128xf32, #tpu.memory_space<vmem>>, %arg3: memref<8x128xf32, #tpu.memory_space<vmem>>) attributes {dimension_semantics = [], scalar_prefetch = 0 : i64, scratch_operands = 0 : i64, tpu.core_type = #tpu.core_type<tc>} {
    %c0 = arith.constant 0 : index
    %c0_0 = arith.constant 0 : index
    %0 = vector.load %arg0[%c0, %c0_0] : memref<8x2048xf32, #tpu.memory_space<vmem>>, vector<8x2048xf32>
    %1 = arith.truncf %0 : vector<8x2048xf32> to vector<8x2048xbf16>
    %c0_1 = arith.constant 0 : index
    %c0_2 = arith.constant 0 : index
    %2 = vector.load %arg1[%c0_1, %c0_2] : memref<2048x128xbf16, #tpu.memory_space<vmem>>, vector<2048x128xbf16>
    %cst = arith.constant dense<0.000000e+00> : vector<8x128xf32>
    %3 = tpu.matmul %1, %2, %cst {dimension_numbers = #tpu.dot_dimension_numbers<[1], [0], [0], [1], [0, 0, 1, 1], [], []>} : vector<8x2048xbf16>, vector<2048x128xbf16>, vector<8x128xf32> -> vector<8x128xf32>
    %c0_3 = arith.constant 0 : index
    %c0_4 = arith.constant 0 : index
    %4 = vector.load %arg2[%c0_3, %c0_4] : memref<1x128xf32, #tpu.memory_space<vmem>>, vector<1x128xf32>
    %5 = vector.broadcast %4 : vector<1x128xf32> to vector<8x128xf32>
    %6 = arith.addf %3, %5 : vector<8x128xf32>
    %c0_5 = arith.constant 0 : index
    %c0_6 = arith.constant 0 : index
    %7 = vector.load %arg3[%c0_5, %c0_6] : memref<8x128xf32, #tpu.memory_space<vmem>>, vector<8x128xf32>
    tpu.vector_store %arg3[%c0_5, %c0_6], %6 {strides = array<i32>} : memref<8x128xf32, #tpu.memory_space<vmem>>, vector<8x128xf32>,
    return
  }
}

</mosaic_0001>

<llo_original>
// kernel: net_forward.1
$region0: #{net_forward.1}
  #allocation0 [shape = 'u32[]', space=smem, size = 0x4, offset = 0x4, fixed_abs, tag = 'smem constant byte address 0x4 - core index']
  #allocation1 [shape = 'u32[144,128]{1,0:T(1,128)}', space=vmem, size = 0x12000, scoped, tag = 'internal scratch']
  %s0 = inlined_call_operand.vmem [shape: f32[8,2048], index: 0, kind: input, shape index: {}]
  %s1 = inlined_call_operand.hbm [shape: bf16[2048,128], index: 1, kind: input, shape index: {}]
  %s2 = inlined_call_operand.vmem [shape: f32[1,128], index: 2, kind: input, shape index: {}]
  %s3 = inlined_call_operand.vmem [shape: f32[8,128], index: 3, kind: output, shape index: {}]
  %s4 = sld [smem:[#allocation0]]
  $region26: #{net_forward.1} parent=0
    _
  %s6 = ssub.s32 1, %s4
  %s7 = scalar_select 0, %s6, %s4
  $region1: #{net_forward.1} parent=0
    #allocation2 [shape = 'u8[524288]{0}', space=vmem, size = 0x80000, scoped, tag = 'input window, operand 1, single buffered']
    #allocation3 [shape = 's32[1]{0}', space=sflag, size = 0x4, scoped, tag = 'scoped memory for net_forward.1']
    %8 = vsyncpa [#allocation3], 0
    // Predicated region
    $region2: #{net_forward.1} parent=1 // pred_check
      _
    $region3: #{net_forward.1} parent=1 // pred_check_branch
      %10 = sbr.rel (0) target = $region5
    $region4: #{net_forward.1} parent=1 // pred_region
      _
    $region5: #{net_forward.1} parent=1 // pred_fallthru
      _
    // Predicated region
    $region6: #{net_forward.1} parent=1 // pred_check
      _
    $region7: #{net_forward.1} parent=1 // pred_check_branch
      %12 = sbr.rel (0) target = $region9
    $region8: #{net_forward.1} parent=1 // pred_region
      %s14 = ssub.s32 16384, 16384
      %15 = vsyncadd [#allocation3], %s14
      %s16 = sshll.u32 [#allocation2], 4
      %s17 = int_to_ptr.vmem [resolvable:$true] %s16
      %22 = dma.hbm_to_vmem [thread:$0]  %s1, 16384, %s17, [#allocation3], 64, 64, 4
    $region9: #{net_forward.1} parent=1 // pred_fallthru
      _
    // Predicated region
    $region10: #{net_forward.1} parent=1 // pred_check
      _
    $region11: #{net_forward.1} parent=1 // pred_check_branch
      %24 = sbr.rel (0) target = $region13
    $region12: #{net_forward.1} parent=1 // pred_region
      _
    $region13: #{net_forward.1} parent=1 // pred_fallthru
      _
    // Predicated region
    $region14: #{net_forward.1} parent=1 // pred_check
      _
    $region15: #{net_forward.1} parent=1 // pred_check_branch
      %26 = sbr.rel (0) target = $region17
    $region16: #{net_forward.1} parent=1 // pred_region
      %27 = dma.done [#allocation3], 16384
    $region17: #{net_forward.1} parent=1 // pred_fallthru
      _
    %v29 = vld [vmem:[%s0] sm:$0xff]
    %v30 = vld [vmem:[%s0 + $0x8] sm:$0xff]
    %v31 = vld [vmem:[%s0 + $0x10] sm:$0xff]
    %v32 = vld [vmem:[%s0 + $0x18] sm:$0xff]
    %v33 = vld [vmem:[%s0 + $0x20] sm:$0xff]
    %v34 = vld [vmem:[%s0 + $0x28] sm:$0xff]
    %v35 = vld [vmem:[%s0 + $0x30] sm:$0xff]
    %v36 = vld [vmem:[%s0 + $0x38] sm:$0xff]
    %v37 = vld [vmem:[%s0 + $0x40] sm:$0xff]
    %v38 = vld [vmem:[%s0 + $0x48] sm:$0xff]
    %v39 = vld [vmem:[%s0 + $0x50] sm:$0xff]
    %v40 = vld [vmem:[%s0 + $0x58] sm:$0xff]
    %v41 = vld [vmem:[%s0 + $0x60] sm:$0xff]
    %v42 = vld [vmem:[%s0 + $0x68] sm:$0xff]
    %v43 = vld [vmem:[%s0 + $0x70] sm:$0xff]
    %v44 = vld [vmem:[%s0 + $0x78] sm:$0xff]
    %v45 = vpack.c.bf16 %v29, %v29
    %v46 = vpack.c.bf16 %v30, %v30
    %v47 = vpack.c.bf16 %v31, %v31
    %v48 = vpack.c.bf16 %v32, %v32
    %v49 = vpack.c.bf16 %v33, %v33
    %v50 = vpack.c.bf16 %v34, %v34
    %v51 = vpack.c.bf16 %v35, %v35
    %v52 = vpack.c.bf16 %v36, %v36
    %v53 = vpack.c.bf16 %v37, %v37
    %v54 = vpack.c.bf16 %v38, %v38
    %v55 = vpack.c.bf16 %v39, %v39
    %v56 = vpack.c.bf16 %v40, %v40
    %v57 = vpack.c.bf16 %v41, %v41
    %v58 = vpack.c.bf16 %v42, %v42
    %v59 = vpack.c.bf16 %v43, %v43
    %v60 = vpack.c.bf16 %v44, %v44
    %v61 = vld [vmem:[#allocation2] sm:$0xf]
    %v62 = vld [vmem:[#allocation2 + $0x4] sm:$0xf]
    %v63 = vld [vmem:[#allocation2 + $0x8] sm:$0xf]
    %v64 = vld [vmem:[#allocation2 + $0xc] sm:$0xf]
    %v65 = vld [vmem:[#allocation2 + $0x10] sm:$0xf]
    %v66 = vld [vmem:[#allocation2 + $0x14] sm:$0xf]
    %v67 = vld [vmem:[#allocation2 + $0x18] sm:$0xf]
    %v68 = vld [vmem:[#allocation2 + $0x1c] sm:$0xf]
    %v69 = vld [vmem:[#allocation2 + $0x20] sm:$0xf]
    %v70 = vld [vmem:[#allocation2 + $0x24] sm:$0xf]
    %v71 = vld [vmem:[#allocation2 + $0x28] sm:$0xf]
    %v72 = vld [vmem:[#allocation2 + $0x2c] sm:$0xf]
    %v73 = vld [vmem:[#allocation2 + $0x30] sm:$0xf]
    %v74 = vld [vmem:[#allocation2 + $0x34] sm:$0xf]
    %v75 = vld [vmem:[#allocation2 + $0x38] sm:$0xf]
    %v76 = vld [vmem:[#allocation2 + $0x3c] sm:$0xf]
    %v77 = vld [vmem:[#allocation2 + $0x40] sm:$0xf]
    %v78 = vld [vmem:[#allocation2 + $0x44] sm:$0xf]
    %v79 = vld [vmem:[#allocation2 + $0x48] sm:$0xf]
    %v80 = vld [vmem:[#allocation2 + $0x4c] sm:$0xf]
    %v81 = vld [vmem:[#allocation2 + $0x50] sm:$0xf]
    %v82 = vld [vmem:[#allocation2 + $0x54] sm:$0xf]
    %v83 = vld [vmem:[#allocation2 + $0x58] sm:$0xf]
    %v84 = vld [vmem:[#allocation2 + $0x5c] sm:$0xf]
    %v85 = vld [vmem:[#allocation2 + $0x60] sm:$0xf]
    %v86 = vld [vmem:[#allocation2 + $0x64] sm:$0xf]
    %v87 = vld [vmem:[#allocation2 + $0x68] sm:$0xf]
    %v88 = vld [vmem:[#allocation2 + $0x6c] sm:$0xf]
    %v89 = vld [vmem:[#allocation2 + $0x70] sm:$0xf]
    %v90 = vld [vmem:[#allocation2 + $0x74] sm:$0xf]
    %v91 = vld [vmem:[#allocation2 + $0x78] sm:$0xf]
    %v92 = vld [vmem:[#allocation2 + $0x7c] sm:$0xf]
    %v93 = vld [vmem:[#allocation2 + $0x80] sm:$0xf]
    %v94 = vld [vmem:[#allocation2 + $0x84] sm:$0xf]
    %v95 = vld [vmem:[#allocation2 + $0x88] sm:$0xf]
    %v96 = vld [vmem:[#allocation2 + $0x8c] sm:$0xf]
    %v97 = vld [vmem:[#allocation2 + $0x90] sm:$0xf]
    %v98 = vld [vmem:[#allocation2 + $0x94] sm:$0xf]
    %v99 = vld [vmem:[#allocation2 + $0x98] sm:$0xf]
    %v100 = vld [vmem:[#allocation2 + $0x9c] sm:$0xf]
    %v101 = vld [vmem:[#allocation2 + $0xa0] sm:$0xf]
    %v102 = vld [vmem:[#allocation2 + $0xa4] sm:$0xf]
    %v103 = vld [vmem:[#allocation2 + $0xa8] sm:$0xf]
    %v104 = vld [vmem:[#allocation2 + $0xac] sm:$0xf]
    %v105 = vld [vmem:[#allocation2 + $0xb0] sm:$0xf]
    %v106 = vld [vmem:[#allocation2 + $0xb4] sm:$0xf]
    %v107 = vld [vmem:[#allocation2 + $0xb8] sm:$0xf]
    %v108 = vld [vmem:[#allocation2 + $0xbc] sm:$0xf]
    %v109 = vld [vmem:[#allocation2 + $0xc0] sm:$0xf]
    %v110 = vld [vmem:[#allocation2 + $0xc4] sm:$0xf]
    %v111 = vld [vmem:[#allocation2 + $0xc8] sm:$0xf]
    %v112 = vld [vmem:[#allocation2 + $0xcc] sm:$0xf]
    %v113 = vld [vmem:[#allocation2 + $0xd0] sm:$0xf]
    %v114 = vld [vmem:[#allocation2 + $0xd4] sm:$0xf]
    %v115 = vld [vmem:[#allocation2 + $0xd8] sm:$0xf]
    %v116 = vld [vmem:[#allocation2 + $0xdc] sm:$0xf]
    %v117 = vld [vmem:[#allocation2 + $0xe0] sm:$0xf]
    %v118 = vld [vmem:[#allocation2 + $0xe4] sm:$0xf]
    %v119 = vld [vmem:[#allocation2 + $0xe8] sm:$0xf]
    %v120 = vld [vmem:[#allocation2 + $0xec] sm:$0xf]
    %v121 = vld [vmem:[#allocation2 + $0xf0] sm:$0xf]
    %v122 = vld [vmem:[#allocation2 + $0xf4] sm:$0xf]
    %v123 = vld [vmem:[#allocation2 + $0xf8] sm:$0xf]
    %v124 = vld [vmem:[#allocation2 + $0xfc] sm:$0xf]
    %v125 = vld [vmem:[#allocation2 + $0x100] sm:$0xf]
    %v126 = vld [vmem:[#allocation2 + $0x104] sm:$0xf]
    %v127 = vld [vmem:[#allocation2 + $0x108] sm:$0xf]
    %v128 = vld [vmem:[#allocation2 + $0x10c] sm:$0xf]
    %v129 = vld [vmem:[#allocation2 + $0x110] sm:$0xf]
    %v130 = vld [vmem:[#allocation2 + $0x114] sm:$0xf]
    %v131 = vld [vmem:[#allocation2 + $0x118] sm:$0xf]
    %v132 = vld [vmem:[#allocation2 + $0x11c] sm:$0xf]
    %v133 = vld [vmem:[#allocation2 + $0x120] sm:$0xf]
    %v134 = vld [vmem:[#allocation2 + $0x124] sm:$0xf]
    %v135 = vld [vmem:[#allocation2 + $0x128] sm:$0xf]
    %v136 = vld [vmem:[#allocation2 + $0x12c] sm:$0xf]
    %v137 = vld [vmem:[#allocation2 + $0x130] sm:$0xf]
    %v138 = vld [vmem:[#allocation2 + $0x134] sm:$0xf]
    %v139 = vld [vmem:[#allocation2 + $0x138] sm:$0xf]
    %v140 = vld [vmem:[#allocation2 + $0x13c] sm:$0xf]
    %v141 = vld [vmem:[#allocation2 + $0x140] sm:$0xf]
    %v142 = vld [vmem:[#allocation2 + $0x144] sm:$0xf]
    %v143 = vld [vmem:[#allocation2 + $0x148] sm:$0xf]
    %v144 = vld [vmem:[#allocation2 + $0x14c] sm:$0xf]
    %v145 = vld [vmem:[#allocation2 + $0x150] sm:$0xf]
    %v146 = vld [vmem:[#allocation2 + $0x154] sm:$0xf]
    %v147 = vld [vmem:[#allocation2 + $0x158] sm:$0xf]
    %v148 = vld [vmem:[#allocation2 + $0x15c] sm:$0xf]
    %v149 = vld [vmem:[#allocation2 + $0x160] sm:$0xf]
    %v150 = vld [vmem:[#allocation2 + $0x164] sm:$0xf]
    %v151 = vld [vmem:[#allocation2 + $0x168] sm:$0xf]
    %v152 = vld [vmem:[#allocation2 + $0x16c] sm:$0xf]
    %v153 = vld [vmem:[#allocation2 + $0x170] sm:$0xf]
    %v154 = vld [vmem:[#allocation2 + $0x174] sm:$0xf]
    %v155 = vld [vmem:[#allocation2 + $0x178] sm:$0xf]
    %v156 = vld [vmem:[#allocation2 + $0x17c] sm:$0xf]
    %v157 = vld [vmem:[#allocation2 + $0x180] sm:$0xf]
    %v158 = vld [vmem:[#allocation2 + $0x184] sm:$0xf]
    %v159 = vld [vmem:[#allocation2 + $0x188] sm:$0xf]
    %v160 = vld [vmem:[#allocation2 + $0x18c] sm:$0xf]
    %v161 = vld [vmem:[#allocation2 + $0x190] sm:$0xf]
    %v162 = vld [vmem:[#allocation2 + $0x194] sm:$0xf]
    %v163 = vld [vmem:[#allocation2 + $0x198] sm:$0xf]
    %v164 = vld [vmem:[#allocation2 + $0x19c] sm:$0xf]
    %v165 = vld [vmem:[#allocation2 + $0x1a0] sm:$0xf]
    %v166 = vld [vmem:[#allocation2 + $0x1a4] sm:$0xf]
    %v167 = vld [vmem:[#allocation2 + $0x1a8] sm:$0xf]
    %v168 = vld [vmem:[#allocation2 + $0x1ac] sm:$0xf]
    %v169 = vld [vmem:[#allocation2 + $0x1b0] sm:$0xf]
    %v170 = vld [vmem:[#allocation2 + $0x1b4] sm:$0xf]
    %v171 = vld [vmem:[#allocation2 + $0x1b8] sm:$0xf]
    %v172 = vld [vmem:[#allocation2 + $0x1bc] sm:$0xf]
    %v173 = vld [vmem:[#allocation2 + $0x1c0] sm:$0xf]
    %v174 = vld [vmem:[#allocation2 + $0x1c4] sm:$0xf]
    %v175 = vld [vmem:[#allocation2 + $0x1c8] sm:$0xf]
    %v176 = vld [vmem:[#allocation2 + $0x1cc] sm:$0xf]
    %v177 = vld [vmem:[#allocation2 + $0x1d0] sm:$0xf]
    %v178 = vld [vmem:[#allocation2 + $0x1d4] sm:$0xf]
    %v179 = vld [vmem:[#allocation2 + $0x1d8] sm:$0xf]
    %v180 = vld [vmem:[#allocation2 + $0x1dc] sm:$0xf]
    %v181 = vld [vmem:[#allocation2 + $0x1e0] sm:$0xf]
    %v182 = vld [vmem:[#allocation2 + $0x1e4] sm:$0xf]
    %v183 = vld [vmem:[#allocation2 + $0x1e8] sm:$0xf]
    %v184 = vld [vmem:[#allocation2 + $0x1ec] sm:$0xf]
    %v185 = vld [vmem:[#allocation2 + $0x1f0] sm:$0xf]
    %v186 = vld [vmem:[#allocation2 + $0x1f4] sm:$0xf]
    %v187 = vld [vmem:[#allocation2 + $0x1f8] sm:$0xf]
    %v188 = vld [vmem:[#allocation2 + $0x1fc] sm:$0xf]
    %v189 = vld [vmem:[#allocation2 + $0x200] sm:$0xf]
    %v190 = vld [vmem:[#allocation2 + $0x204] sm:$0xf]
    %v191 = vld [vmem:[#allocation2 + $0x208] sm:$0xf]
    %v192 = vld [vmem:[#allocation2 + $0x20c] sm:$0xf]
    %v193 = vld [vmem:[#allocation2 + $0x210] sm:$0xf]
    %v194 = vld [vmem:[#allocation2 + $0x214] sm:$0xf]
    %v195 = vld [vmem:[#allocation2 + $0x218] sm:$0xf]
    %v196 = vld [vmem:[#allocation2 + $0x21c] sm:$0xf]
    %v197 = vld [vmem:[#allocation2 + $0x220] sm:$0xf]
    %v198 = vld [vmem:[#allocation2 + $0x224] sm:$0xf]
    %v199 = vld [vmem:[#allocation2 + $0x228] sm:$0xf]
    %v200 = vld [vmem:[#allocation2 + $0x22c] sm:$0xf]
    %v201 = vld [vmem:[#allocation2 + $0x230] sm:$0xf]
    %v202 = vld [vmem:[#allocation2 + $0x234] sm:$0xf]
    %v203 = vld [vmem:[#allocation2 + $0x238] sm:$0xf]
    %v204 = vld [vmem:[#allocation2 + $0x23c] sm:$0xf]
    %v205 = vld [vmem:[#allocation2 + $0x240] sm:$0xf]
    %v206 = vld [vmem:[#allocation2 + $0x244] sm:$0xf]
    %v207 = vld [vmem:[#allocation2 + $0x248] sm:$0xf]
    %v208 = vld [vmem:[#allocation2 + $0x24c] sm:$0xf]
    %v209 = vld [vmem:[#allocation2 + $0x250] sm:$0xf]
    %v210 = vld [vmem:[#allocation2 + $0x254] sm:$0xf]
    %v211 = vld [vmem:[#allocation2 + $0x258] sm:$0xf]
    %v212 = vld [vmem:[#allocation2 + $0x25c] sm:$0xf]
    %v213 = vld [vmem:[#allocation2 + $0x260] sm:$0xf]
    %v214 = vld [vmem:[#allocation2 + $0x264] sm:$0xf]
    %v215 = vld [vmem:[#allocation2 + $0x268] sm:$0xf]
    %v216 = vld [vmem:[#allocation2 + $0x26c] sm:$0xf]
    %v217 = vld [vmem:[#allocation2 + $0x270] sm:$0xf]
    %v218 = vld [vmem:[#allocation2 + $0x274] sm:$0xf]
    %v219 = vld [vmem:[#allocation2 + $0x278] sm:$0xf]
    %v220 = vld [vmem:[#allocation2 + $0x27c] sm:$0xf]
    %v221 = vld [vmem:[#allocation2 + $0x280] sm:$0xf]
    %v222 = vld [vmem:[#allocation2 + $0x284] sm:$0xf]
    %v223 = vld [vmem:[#allocation2 + $0x288] sm:$0xf]
    %v224 = vld [vmem:[#allocation2 + $0x28c] sm:$0xf]
    %v225 = vld [vmem:[#allocation2 + $0x290] sm:$0xf]
    %v226 = vld [vmem:[#allocation2 + $0x294] sm:$0xf]
    %v227 = vld [vmem:[#allocation2 + $0x298] sm:$0xf]
    %v228 = vld [vmem:[#allocation2 + $0x29c] sm:$0xf]
    %v229 = vld [vmem:[#allocation2 + $0x2a0] sm:$0xf]
    %v230 = vld [vmem:[#allocation2 + $0x2a4] sm:$0xf]
    %v231 = vld [vmem:[#allocation2 + $0x2a8] sm:$0xf]
    %v232 = vld [vmem:[#allocation2 + $0x2ac] sm:$0xf]
    %v233 = vld [vmem:[#allocation2 + $0x2b0] sm:$0xf]
    %v234 = vld [vmem:[#allocation2 + $0x2b4] sm:$0xf]
    %v235 = vld [vmem:[#allocation2 + $0x2b8] sm:$0xf]
    %v236 = vld [vmem:[#allocation2 + $0x2bc] sm:$0xf]
    %v237 = vld [vmem:[#allocation2 + $0x2c0] sm:$0xf]
    %v238 = vld [vmem:[#allocation2 + $0x2c4] sm:$0xf]
    %v239 = vld [vmem:[#allocation2 + $0x2c8] sm:$0xf]
    %v240 = vld [vmem:[#allocation2 + $0x2cc] sm:$0xf]
    %v241 = vld [vmem:[#allocation2 + $0x2d0] sm:$0xf]
    %v242 = vld [vmem:[#allocation2 + $0x2d4] sm:$0xf]
    %v243 = vld [vmem:[#allocation2 + $0x2d8] sm:$0xf]
    %v244 = vld [vmem:[#allocation2 + $0x2dc] sm:$0xf]
    %v245 = vld [vmem:[#allocation2 + $0x2e0] sm:$0xf]
    %v246 = vld [vmem:[#allocation2 + $0x2e4] sm:$0xf]
    %v247 = vld [vmem:[#allocation2 + $0x2e8] sm:$0xf]
    %v248 = vld [vmem:[#allocation2 + $0x2ec] sm:$0xf]
    %v249 = vld [vmem:[#allocation2 + $0x2f0] sm:$0xf]
    %v250 = vld [vmem:[#allocation2 + $0x2f4] sm:$0xf]
    %v251 = vld [vmem:[#allocation2 + $0x2f8] sm:$0xf]
    %v252 = vld [vmem:[#allocation2 + $0x2fc] sm:$0xf]
    %v253 = vld [vmem:[#allocation2 + $0x300] sm:$0xf]
    %v254 = vld [vmem:[#allocation2 + $0x304] sm:$0xf]
    %v255 = vld [vmem:[#allocation2 + $0x308] sm:$0xf]
    %v256 = vld [vmem:[#allocation2 + $0x30c] sm:$0xf]
    %v257 = vld [vmem:[#allocation2 + $0x310] sm:$0xf]
    %v258 = vld [vmem:[#allocation2 + $0x314] sm:$0xf]
    %v259 = vld [vmem:[#allocation2 + $0x318] sm:$0xf]
    %v260 = vld [vmem:[#allocation2 + $0x31c] sm:$0xf]
    %v261 = vld [vmem:[#allocation2 + $0x320] sm:$0xf]
    %v262 = vld [vmem:[#allocation2 + $0x324] sm:$0xf]
    %v263 = vld [vmem:[#allocation2 + $0x328] sm:$0xf]
    %v264 = vld [vmem:[#allocation2 + $0x32c] sm:$0xf]
    %v265 = vld [vmem:[#allocation2 + $0x330] sm:$0xf]
    %v266 = vld [vmem:[#allocation2 + $0x334] sm:$0xf]
    %v267 = vld [vmem:[#allocation2 + $0x338] sm:$0xf]
    %v268 = vld [vmem:[#allocation2 + $0x33c] sm:$0xf]
    %v269 = vld [vmem:[#allocation2 + $0x340] sm:$0xf]
    %v270 = vld [vmem:[#allocation2 + $0x344] sm:$0xf]
    %v271 = vld [vmem:[#allocation2 + $0x348] sm:$0xf]
    %v272 = vld [vmem:[#allocation2 + $0x34c] sm:$0xf]
    %v273 = vld [vmem:[#allocation2 + $0x350] sm:$0xf]
    %v274 = vld [vmem:[#allocation2 + $0x354] sm:$0xf]
    %v275 = vld [vmem:[#allocation2 + $0x358] sm:$0xf]
    %v276 = vld [vmem:[#allocation2 + $0x35c] sm:$0xf]
    %v277 = vld [vmem:[#allocation2 + $0x360] sm:$0xf]
    %v278 = vld [vmem:[#allocation2 + $0x364] sm:$0xf]
    %v279 = vld [vmem:[#allocation2 + $0x368] sm:$0xf]
    %v280 = vld [vmem:[#allocation2 + $0x36c] sm:$0xf]
    %v281 = vld [vmem:[#allocation2 + $0x370] sm:$0xf]
    %v282 = vld [vmem:[#allocation2 + $0x374] sm:$0xf]
    %v283 = vld [vmem:[#allocation2 + $0x378] sm:$0xf]
    %v284 = vld [vmem:[#allocation2 + $0x37c] sm:$0xf]
    %v285 = vld [vmem:[#allocation2 + $0x380] sm:$0xf]
    %v286 = vld [vmem:[#allocation2 + $0x384] sm:$0xf]
    %v287 = vld [vmem:[#allocation2 + $0x388] sm:$0xf]
    %v288 = vld [vmem:[#allocation2 + $0x38c] sm:$0xf]
    %v289 = vld [vmem:[#allocation2 + $0x390] sm:$0xf]
    %v290 = vld [vmem:[#allocation2 + $0x394] sm:$0xf]
    %v291 = vld [vmem:[#allocation2 + $0x398] sm:$0xf]
    %v292 = vld [vmem:[#allocation2 + $0x39c] sm:$0xf]
    %v293 = vld [vmem:[#allocation2 + $0x3a0] sm:$0xf]
    %v294 = vld [vmem:[#allocation2 + $0x3a4] sm:$0xf]
    %v295 = vld [vmem:[#allocation2 + $0x3a8] sm:$0xf]
    %v296 = vld [vmem:[#allocation2 + $0x3ac] sm:$0xf]
    %v297 = vld [vmem:[#allocation2 + $0x3b0] sm:$0xf]
    %v298 = vld [vmem:[#allocation2 + $0x3b4] sm:$0xf]
    %v299 = vld [vmem:[#allocation2 + $0x3b8] sm:$0xf]
    %v300 = vld [vmem:[#allocation2 + $0x3bc] sm:$0xf]
    %v301 = vld [vmem:[#allocation2 + $0x3c0] sm:$0xf]
    %v302 = vld [vmem:[#allocation2 + $0x3c4] sm:$0xf]
    %v303 = vld [vmem:[#allocation2 + $0x3c8] sm:$0xf]
    %v304 = vld [vmem:[#allocation2 + $0x3cc] sm:$0xf]
    %v305 = vld [vmem:[#allocation2 + $0x3d0] sm:$0xf]
    %v306 = vld [vmem:[#allocation2 + $0x3d4] sm:$0xf]
    %v307 = vld [vmem:[#allocation2 + $0x3d8] sm:$0xf]
    %v308 = vld [vmem:[#allocation2 + $0x3dc] sm:$0xf]
    %v309 = vld [vmem:[#allocation2 + $0x3e0] sm:$0xf]
    %v310 = vld [vmem:[#allocation2 + $0x3e4] sm:$0xf]
    %v311 = vld [vmem:[#allocation2 + $0x3e8] sm:$0xf]
    %v312 = vld [vmem:[#allocation2 + $0x3ec] sm:$0xf]
    %v313 = vld [vmem:[#allocation2 + $0x3f0] sm:$0xf]
    %v314 = vld [vmem:[#allocation2 + $0x3f4] sm:$0xf]
    %v315 = vld [vmem:[#allocation2 + $0x3f8] sm:$0xf]
    %v316 = vld [vmem:[#allocation2 + $0x3fc] sm:$0xf]
    %v317 = vld [vmem:[%s2] sm:$0x1]
    %v319 = vlaneseq
    %v320 = vshrl.u32 %v319, 7
    %v321 = vsub.s32 0, %v320
    %v322 = vrot.slane %v317, %v321
    %v580 = vunpack.c.l.b16 %v61
    %v581 = vunpack.c.l.b16 %v62
    %v582 = vunpack.c.l.b16 %v63
    %v583 = vunpack.c.l.b16 %v64
    %v584 = vunpack.c.l.b16 %v65
    %v585 = vunpack.c.l.b16 %v66
    %v586 = vunpack.c.l.b16 %v67
    %v587 = vunpack.c.l.b16 %v68
    %v588 = vunpack.c.l.b16 %v69
    %v589 = vunpack.c.l.b16 %v70
    %v590 = vunpack.c.l.b16 %v71
    %v591 = vunpack.c.l.b16 %v72
    %v592 = vunpack.c.l.b16 %v73
    %v593 = vunpack.c.l.b16 %v74
    %v594 = vunpack.c.l.b16 %v75
    %v595 = vunpack.c.l.b16 %v76
    %v596 = vunpack.c.l.b16 %v77
    %v597 = vunpack.c.l.b16 %v78
    %v598 = vunpack.c.l.b16 %v79
    %v599 = vunpack.c.l.b16 %v80
    %v600 = vunpack.c.l.b16 %v81
    %v601 = vunpack.c.l.b16 %v82
    %v602 = vunpack.c.l.b16 %v83
    %v603 = vunpack.c.l.b16 %v84
    %v604 = vunpack.c.l.b16 %v85
    %v605 = vunpack.c.l.b16 %v86
    %v606 = vunpack.c.l.b16 %v87
    %v607 = vunpack.c.l.b16 %v88
    %v608 = vunpack.c.l.b16 %v89
    %v609 = vunpack.c.l.b16 %v90
    %v610 = vunpack.c.l.b16 %v91
    %v611 = vunpack.c.l.b16 %v92
    %v612 = vunpack.c.l.b16 %v93
    %v613 = vunpack.c.l.b16 %v94
    %v614 = vunpack.c.l.b16 %v95
    %v615 = vunpack.c.l.b16 %v96
    %v616 = vunpack.c.l.b16 %v97
    %v617 = vunpack.c.l.b16 %v98
    %v618 = vunpack.c.l.b16 %v99
    %v619 = vunpack.c.l.b16 %v100
    %v620 = vunpack.c.l.b16 %v101
    %v621 = vunpack.c.l.b16 %v102
    %v622 = vunpack.c.l.b16 %v103
    %v623 = vunpack.c.l.b16 %v104
    %v624 = vunpack.c.l.b16 %v105
    %v625 = vunpack.c.l.b16 %v106
    %v626 = vunpack.c.l.b16 %v107
    %v627 = vunpack.c.l.b16 %v108
    %v628 = vunpack.c.l.b16 %v109
    %v629 = vunpack.c.l.b16 %v110
    %v630 = vunpack.c.l.b16 %v111
    %v631 = vunpack.c.l.b16 %v112
    %v632 = vunpack.c.l.b16 %v113
    %v633 = vunpack.c.l.b16 %v114
    %v634 = vunpack.c.l.b16 %v115
    %v635 = vunpack.c.l.b16 %v116
    %v636 = vunpack.c.l.b16 %v117
    %v637 = vunpack.c.l.b16 %v118
    %v638 = vunpack.c.l.b16 %v119
    %v639 = vunpack.c.l.b16 %v120
    %v640 = vunpack.c.l.b16 %v121
    %v641 = vunpack.c.l.b16 %v122
    %v642 = vunpack.c.l.b16 %v123
    %v643 = vunpack.c.l.b16 %v124
    %v644 = vunpack.c.l.b16 %v125
    %v645 = vunpack.c.l.b16 %v126
    %v646 = vunpack.c.l.b16 %v127
    %v647 = vunpack.c.l.b16 %v128
    %v648 = vunpack.c.l.b16 %v129
    %v649 = vunpack.c.l.b16 %v130
    %v650 = vunpack.c.l.b16 %v131
    %v651 = vunpack.c.l.b16 %v132
    %v652 = vunpack.c.l.b16 %v133
    %v653 = vunpack.c.l.b16 %v134
    %v654 = vunpack.c.l.b16 %v135
    %v655 = vunpack.c.l.b16 %v136
    %v656 = vunpack.c.l.b16 %v137
    %v657 = vunpack.c.l.b16 %v138
    %v658 = vunpack.c.l.b16 %v139
    %v659 = vunpack.c.l.b16 %v140
    %v660 = vunpack.c.l.b16 %v141
    %v661 = vunpack.c.l.b16 %v142
    %v662 = vunpack.c.l.b16 %v143
    %v663 = vunpack.c.l.b16 %v144
    %v664 = vunpack.c.l.b16 %v145
    %v665 = vunpack.c.l.b16 %v146
    %v666 = vunpack.c.l.b16 %v147
    %v667 = vunpack.c.l.b16 %v148
    %v668 = vunpack.c.l.b16 %v149
    %v669 = vunpack.c.l.b16 %v150
    %v670 = vunpack.c.l.b16 %v151
    %v671 = vunpack.c.l.b16 %v152
    %v672 = vunpack.c.l.b16 %v153
    %v673 = vunpack.c.l.b16 %v154
    %v674 = vunpack.c.l.b16 %v155
    %v675 = vunpack.c.l.b16 %v156
    %v676 = vunpack.c.l.b16 %v157
    %v677 = vunpack.c.l.b16 %v158
    %v678 = vunpack.c.l.b16 %v159
    %v679 = vunpack.c.l.b16 %v160
    %v680 = vunpack.c.l.b16 %v161
    %v681 = vunpack.c.l.b16 %v162
    %v682 = vunpack.c.l.b16 %v163
    %v683 = vunpack.c.l.b16 %v164
    %v684 = vunpack.c.l.b16 %v165
    %v685 = vunpack.c.l.b16 %v166
    %v686 = vunpack.c.l.b16 %v167
    %v687 = vunpack.c.l.b16 %v168
    %v688 = vunpack.c.l.b16 %v169
    %v689 = vunpack.c.l.b16 %v170
    %v690 = vunpack.c.l.b16 %v171
    %v691 = vunpack.c.l.b16 %v172
    %v692 = vunpack.c.l.b16 %v173
    %v693 = vunpack.c.l.b16 %v174
    %v694 = vunpack.c.l.b16 %v175
    %v695 = vunpack.c.l.b16 %v176
    %v696 = vunpack.c.l.b16 %v177
    %v697 = vunpack.c.l.b16 %v178
    %v698 = vunpack.c.l.b16 %v179
    %v699 = vunpack.c.l.b16 %v180
    %v700 = vunpack.c.l.b16 %v181
    %v701 = vunpack.c.l.b16 %v182
    %v702 = vunpack.c.l.b16 %v183
    %v703 = vunpack.c.l.b16 %v184
    %v704 = vunpack.c.l.b16 %v185
    %v705 = vunpack.c.l.b16 %v186
    %v706 = vunpack.c.l.b16 %v187
    %v707 = vunpack.c.l.b16 %v188
    %v708 = vunpack.c.l.b16 %v189
    %v709 = vunpack.c.l.b16 %v190
    %v710 = vunpack.c.l.b16 %v191
    %v711 = vunpack.c.l.b16 %v192
    %v712 = vunpack.c.l.b16 %v193
    %v713 = vunpack.c.l.b16 %v194
    %v714 = vunpack.c.l.b16 %v195
    %v715 = vunpack.c.l.b16 %v196
    %v716 = vunpack.c.l.b16 %v197
    %v717 = vunpack.c.l.b16 %v198
    %v718 = vunpack.c.l.b16 %v199
    %v719 = vunpack.c.l.b16 %v200
    %v720 = vunpack.c.l.b16 %v201
    %v721 = vunpack.c.l.b16 %v202
    %v722 = vunpack.c.l.b16 %v203
    %v723 = vunpack.c.l.b16 %v204
    %v724 = vunpack.c.l.b16 %v205
    %v725 = vunpack.c.l.b16 %v206
    %v726 = vunpack.c.l.b16 %v207
    %v727 = vunpack.c.l.b16 %v208
    %v728 = vunpack.c.l.b16 %v209
    %v729 = vunpack.c.l.b16 %v210
    %v730 = vunpack.c.l.b16 %v211
    %v731 = vunpack.c.l.b16 %v212
    %v732 = vunpack.c.l.b16 %v213
    %v733 = vunpack.c.l.b16 %v214
    %v734 = vunpack.c.l.b16 %v215
    %v735 = vunpack.c.l.b16 %v216
    %v736 = vunpack.c.l.b16 %v217
    %v737 = vunpack.c.l.b16 %v218
    %v738 = vunpack.c.l.b16 %v219
    %v739 = vunpack.c.l.b16 %v220
    %v740 = vunpack.c.l.b16 %v221
    %v741 = vunpack.c.l.b16 %v222
    %v742 = vunpack.c.l.b16 %v223
    %v743 = vunpack.c.l.b16 %v224
    %v744 = vunpack.c.l.b16 %v225
    %v745 = vunpack.c.l.b16 %v226
    %v746 = vunpack.c.l.b16 %v227
    %v747 = vunpack.c.l.b16 %v228
    %v748 = vunpack.c.l.b16 %v229
    %v749 = vunpack.c.l.b16 %v230
    %v750 = vunpack.c.l.b16 %v231
    %v751 = vunpack.c.l.b16 %v232
    %v752 = vunpack.c.l.b16 %v233
    %v753 = vunpack.c.l.b16 %v234
    %v754 = vunpack.c.l.b16 %v235
    %v755 = vunpack.c.l.b16 %v236
    %v756 = vunpack.c.l.b16 %v237
    %v757 = vunpack.c.l.b16 %v238
    %v758 = vunpack.c.l.b16 %v239
    %v759 = vunpack.c.l.b16 %v240
    %v760 = vunpack.c.l.b16 %v241
    %v761 = vunpack.c.l.b16 %v242
    %v762 = vunpack.c.l.b16 %v243
    %v763 = vunpack.c.l.b16 %v244
    %v764 = vunpack.c.l.b16 %v245
    %v765 = vunpack.c.l.b16 %v246
    %v766 = vunpack.c.l.b16 %v247
    %v767 = vunpack.c.l.b16 %v248
    %v768 = vunpack.c.l.b16 %v249
    %v769 = vunpack.c.l.b16 %v250
    %v770 = vunpack.c.l.b16 %v251
    %v771 = vunpack.c.l.b16 %v252
    %v772 = vunpack.c.l.b16 %v253
    %v773 = vunpack.c.l.b16 %v254
    %v774 = vunpack.c.l.b16 %v255
    %v775 = vunpack.c.l.b16 %v256
    %v776 = vunpack.c.l.b16 %v257
    %v777 = vunpack.c.l.b16 %v258
    %v778 = vunpack.c.l.b16 %v259
    %v779 = vunpack.c.l.b16 %v260
    %v780 = vunpack.c.l.b16 %v261
    %v781 = vunpack.c.l.b16 %v262
    %v782 = vunpack.c.l.b16 %v263
    %v783 = vunpack.c.l.b16 %v264
    %v784 = vunpack.c.l.b16 %v265
    %v785 = vunpack.c.l.b16 %v266
    %v786 = vunpack.c.l.b16 %v267
    %v787 = vunpack.c.l.b16 %v268
    %v788 = vunpack.c.l.b16 %v269
    %v789 = vunpack.c.l.b16 %v270
    %v790 = vunpack.c.l.b16 %v271
    %v791 = vunpack.c.l.b16 %v272
    %v792 = vunpack.c.l.b16 %v273
    %v793 = vunpack.c.l.b16 %v274
    %v794 = vunpack.c.l.b16 %v275
    %v795 = vunpack.c.l.b16 %v276
    %v796 = vunpack.c.l.b16 %v277
    %v797 = vunpack.c.l.b16 %v278
    %v798 = vunpack.c.l.b16 %v279
    %v799 = vunpack.c.l.b16 %v280
    %v800 = vunpack.c.l.b16 %v281
    %v801 = vunpack.c.l.b16 %v282
    %v802 = vunpack.c.l.b16 %v283
    %v803 = vunpack.c.l.b16 %v284
    %v804 = vunpack.c.l.b16 %v285
    %v805 = vunpack.c.l.b16 %v286
    %v806 = vunpack.c.l.b16 %v287
    %v807 = vunpack.c.l.b16 %v288
    %v808 = vunpack.c.l.b16 %v289
    %v809 = vunpack.c.l.b16 %v290
    %v810 = vunpack.c.l.b16 %v291
    %v811 = vunpack.c.l.b16 %v292
    %v812 = vunpack.c.l.b16 %v293
    %v813 = vunpack.c.l.b16 %v294
    %v814 = vunpack.c.l.b16 %v295
    %v815 = vunpack.c.l.b16 %v296
    %v816 = vunpack.c.l.b16 %v297
    %v817 = vunpack.c.l.b16 %v298
    %v818 = vunpack.c.l.b16 %v299
    %v819 = vunpack.c.l.b16 %v300
    %v820 = vunpack.c.l.b16 %v301
    %v821 = vunpack.c.l.b16 %v302
    %v822 = vunpack.c.l.b16 %v303
    %v823 = vunpack.c.l.b16 %v304
    %v824 = vunpack.c.l.b16 %v305
    %v825 = vunpack.c.l.b16 %v306
    %v826 = vunpack.c.l.b16 %v307
    %v827 = vunpack.c.l.b16 %v308
    %v828 = vunpack.c.l.b16 %v309
    %v829 = vunpack.c.l.b16 %v310
    %v830 = vunpack.c.l.b16 %v311
    %v831 = vunpack.c.l.b16 %v312
    %v832 = vunpack.c.l.b16 %v313
    %v833 = vunpack.c.l.b16 %v314
    %v834 = vunpack.c.l.b16 %v315
    %v835 = vunpack.c.l.b16 %v316
    %v836 = vpack.c.b16 %v581, %v580
    %v837 = vpack.c.b16 %v583, %v582
    %v838 = vpack.c.b16 %v585, %v584
    %v839 = vpack.c.b16 %v587, %v586
    %v840 = vpack.c.b16 %v589, %v588
    %v841 = vpack.c.b16 %v591, %v590
    %v842 = vpack.c.b16 %v593, %v592
    %v843 = vpack.c.b16 %v595, %v594
    %v844 = vpack.c.b16 %v597, %v596
    %v845 = vpack.c.b16 %v599, %v598
    %v846 = vpack.c.b16 %v601, %v600
    %v847 = vpack.c.b16 %v603, %v602
    %v848 = vpack.c.b16 %v605, %v604
    %v849 = vpack.c.b16 %v607, %v606
    %v850 = vpack.c.b16 %v609, %v608
    %v851 = vpack.c.b16 %v611, %v610
    %v852 = vpack.c.b16 %v613, %v612
    %v853 = vpack.c.b16 %v615, %v614
    %v854 = vpack.c.b16 %v617, %v616
    %v855 = vpack.c.b16 %v619, %v618
    %v856 = vpack.c.b16 %v621, %v620
    %v857 = vpack.c.b16 %v623, %v622
    %v858 = vpack.c.b16 %v625, %v624
    %v859 = vpack.c.b16 %v627, %v626
    %v860 = vpack.c.b16 %v629, %v628
    %v861 = vpack.c.b16 %v631, %v630
    %v862 = vpack.c.b16 %v633, %v632
    %v863 = vpack.c.b16 %v635, %v634
    %v864 = vpack.c.b16 %v637, %v636
    %v865 = vpack.c.b16 %v639, %v638
    %v866 = vpack.c.b16 %v641, %v640
    %v867 = vpack.c.b16 %v643, %v642
    %v868 = vpack.c.b16 %v645, %v644
    %v869 = vpack.c.b16 %v647, %v646
    %v870 = vpack.c.b16 %v649, %v648
    %v871 = vpack.c.b16 %v651, %v650
    %v872 = vpack.c.b16 %v653, %v652
    %v873 = vpack.c.b16 %v655, %v654
    %v874 = vpack.c.b16 %v657, %v656
    %v875 = vpack.c.b16 %v659, %v658
    %v876 = vpack.c.b16 %v661, %v660
    %v877 = vpack.c.b16 %v663, %v662
    %v878 = vpack.c.b16 %v665, %v664
    %v879 = vpack.c.b16 %v667, %v666
    %v880 = vpack.c.b16 %v669, %v668
    %v881 = vpack.c.b16 %v671, %v670
    %v882 = vpack.c.b16 %v673, %v672
    %v883 = vpack.c.b16 %v675, %v674
    %v884 = vpack.c.b16 %v677, %v676
    %v885 = vpack.c.b16 %v679, %v678
    %v886 = vpack.c.b16 %v681, %v680
    %v887 = vpack.c.b16 %v683, %v682
    %v888 = vpack.c.b16 %v685, %v684
    %v889 = vpack.c.b16 %v687, %v686
    %v890 = vpack.c.b16 %v689, %v688
    %v891 = vpack.c.b16 %v691, %v690
    %v892 = vpack.c.b16 %v693, %v692
    %v893 = vpack.c.b16 %v695, %v694
    %v894 = vpack.c.b16 %v697, %v696
    %v895 = vpack.c.b16 %v699, %v698
    %v896 = vpack.c.b16 %v701, %v700
    %v897 = vpack.c.b16 %v703, %v702
    %v898 = vpack.c.b16 %v705, %v704
    %v899 = vpack.c.b16 %v707, %v706
    %v900 = vpack.c.b16 %v709, %v708
    %v901 = vpack.c.b16 %v711, %v710
    %v902 = vpack.c.b16 %v713, %v712
    %v903 = vpack.c.b16 %v715, %v714
    %v904 = vpack.c.b16 %v717, %v716
    %v905 = vpack.c.b16 %v719, %v718
    %v906 = vpack.c.b16 %v721, %v720
    %v907 = vpack.c.b16 %v723, %v722
    %v908 = vpack.c.b16 %v725, %v724
    %v909 = vpack.c.b16 %v727, %v726
    %v910 = vpack.c.b16 %v729, %v728
    %v911 = vpack.c.b16 %v731, %v730
    %v912 = vpack.c.b16 %v733, %v732
    %v913 = vpack.c.b16 %v735, %v734
    %v914 = vpack.c.b16 %v737, %v736
    %v915 = vpack.c.b16 %v739, %v738
    %v916 = vpack.c.b16 %v741, %v740
    %v917 = vpack.c.b16 %v743, %v742
    %v918 = vpack.c.b16 %v745, %v744
    %v919 = vpack.c.b16 %v747, %v746
    %v920 = vpack.c.b16 %v749, %v748
    %v921 = vpack.c.b16 %v751, %v750
    %v922 = vpack.c.b16 %v753, %v752
    %v923 = vpack.c.b16 %v755, %v754
    %v924 = vpack.c.b16 %v757, %v756
    %v925 = vpack.c.b16 %v759, %v758
    %v926 = vpack.c.b16 %v761, %v760
    %v927 = vpack.c.b16 %v763, %v762
    %v928 = vpack.c.b16 %v765, %v764
    %v929 = vpack.c.b16 %v767, %v766
    %v930 = vpack.c.b16 %v769, %v768
    %v931 = vpack.c.b16 %v771, %v770
    %v932 = vpack.c.b16 %v773, %v772
    %v933 = vpack.c.b16 %v775, %v774
    %v934 = vpack.c.b16 %v777, %v776
    %v935 = vpack.c.b16 %v779, %v778
    %v936 = vpack.c.b16 %v781, %v780
    %v937 = vpack.c.b16 %v783, %v782
    %v938 = vpack.c.b16 %v785, %v784
    %v939 = vpack.c.b16 %v787, %v786
    %v940 = vpack.c.b16 %v789, %v788
    %v941 = vpack.c.b16 %v791, %v790
    %v942 = vpack.c.b16 %v793, %v792
    %v943 = vpack.c.b16 %v795, %v794
    %v944 = vpack.c.b16 %v797, %v796
    %v945 = vpack.c.b16 %v799, %v798
    %v946 = vpack.c.b16 %v801, %v800
    %v947 = vpack.c.b16 %v803, %v802
    %v948 = vpack.c.b16 %v805, %v804
    %v949 = vpack.c.b16 %v807, %v806
    %v950 = vpack.c.b16 %v809, %v808
    %v951 = vpack.c.b16 %v811, %v810
    %v952 = vpack.c.b16 %v813, %v812
    %v953 = vpack.c.b16 %v815, %v814
    %v954 = vpack.c.b16 %v817, %v816
    %v955 = vpack.c.b16 %v819, %v818
    %v956 = vpack.c.b16 %v821, %v820
    %v957 = vpack.c.b16 %v823, %v822
    %v958 = vpack.c.b16 %v825, %v824
    %v959 = vpack.c.b16 %v827, %v826
    %v960 = vpack.c.b16 %v829, %v828
    %v961 = vpack.c.b16 %v831, %v830
    %v962 = vpack.c.b16 %v833, %v832
    %v963 = vpack.c.b16 %v835, %v834
    %1092 = vmatprep.subr.bf16.mxu0 0
    %1093 = vmatpush1.bf16.msra.mxu0 %v843
    %1094 = vmatprep.subr.bf16.mxu0 0
    %1095 = vmatpush1.bf16.msra.mxu0 %v842
    %1096 = vmatprep.subr.bf16.mxu0 0
    %1097 = vmatpush1.bf16.msra.mxu0 %v841
    %1098 = vmatprep.subr.bf16.mxu0 0
    %1099 = vmatpush1.bf16.msra.mxu0 %v840
    %1100 = vmatprep.subr.bf16.mxu0 0
    %1101 = vmatpush1.bf16.msra.mxu0 %v839
    %1102 = vmatprep.subr.bf16.mxu0 0
    %1103 = vmatpush1.bf16.msra.mxu0 %v838
    %1104 = vmatprep.subr.bf16.mxu0 0
    %1105 = vmatpush1.bf16.msra.mxu0 %v837
    %1106 = vmatprep.subr.bf16.mxu0 0
    %1107 = vmatpush1.bf16.msra.mxu0 %v836
    %1108 = vmatprep.subr.bf16.mxu0 0
    %1109 = vmatpush2.bf16.msra.mxu0 %v851
    %1110 = vmatprep.subr.bf16.mxu0 0
    %1111 = vmatpush2.bf16.msra.mxu0 %v850
    %1112 = vmatprep.subr.bf16.mxu0 0
    %1113 = vmatpush2.bf16.msra.mxu0 %v849
    %1114 = vmatprep.subr.bf16.mxu0 0
    %1115 = vmatpush2.bf16.msra.mxu0 %v848
    %1116 = vmatprep.subr.bf16.mxu0 0
    %1117 = vmatpush2.bf16.msra.mxu0 %v847
    %1118 = vmatprep.subr.bf16.mxu0 0
    %1119 = vmatpush2.bf16.msra.mxu0 %v846
    %1120 = vmatprep.subr.bf16.mxu0 0
    %1121 = vmatpush2.bf16.msra.mxu0 %v845
    %1122 = vmatprep.subr.bf16.mxu0 0
    %1123 = vmatpush2.bf16.msra.mxu0 %v844
    %1124 = vmatprep.mubr.bf16.mxu0 %v46
    %1125 = vmatmul.mubr.bf16.gmra.mxu0 %v45
    %v1126 = vpop.f32.mrf.mxu0
    %v1127 = vadd.f32 %v322, %v1126
    %v1128 = vpop.f32.mrf.mxu0
    %v1129 = vpop.f32.mrf.mxu0
    %v1130 = vpop.f32.mrf.mxu0
    %1131 = vdwg.mxu0
    %1132 = vmatprep.subr.bf16.mxu0 0
    %1133 = vmatpush1.bf16.msra.mxu0 %v859
    %1134 = vmatprep.subr.bf16.mxu0 0
    %1135 = vmatpush1.bf16.msra.mxu0 %v858
    %1136 = vmatprep.subr.bf16.mxu0 0
    %1137 = vmatpush1.bf16.msra.mxu0 %v857
    %1138 = vmatprep.subr.bf16.mxu0 0
    %1139 = vmatpush1.bf16.msra.mxu0 %v856
    %1140 = vmatprep.subr.bf16.mxu0 0
    %1141 = vmatpush1.bf16.msra.mxu0 %v855
    %1142 = vmatprep.subr.bf16.mxu0 0
    %1143 = vmatpush1.bf16.msra.mxu0 %v854
    %1144 = vmatprep.subr.bf16.mxu0 0
    %1145 = vmatpush1.bf16.msra.mxu0 %v853
    %1146 = vmatprep.subr.bf16.mxu0 0
    %1147 = vmatpush1.bf16.msra.mxu0 %v852
    %1148 = vmatprep.subr.bf16.mxu0 0
    %1149 = vmatpush2.bf16.msra.mxu0 %v867
    %1150 = vmatprep.subr.bf16.mxu0 0
    %1151 = vmatpush2.bf16.msra.mxu0 %v866
    %1152 = vmatprep.subr.bf16.mxu0 0
    %1153 = vmatpush2.bf16.msra.mxu0 %v865
    %1154 = vmatprep.subr.bf16.mxu0 0
    %1155 = vmatpush2.bf16.msra.mxu0 %v864
    %1156 = vmatprep.subr.bf16.mxu0 0
    %1157 = vmatpush2.bf16.msra.mxu0 %v863
    %1158 = vmatprep.subr.bf16.mxu0 0
    %1159 = vmatpush2.bf16.msra.mxu0 %v862
    %1160 = vmatprep.subr.bf16.mxu0 0
    %1161 = vmatpush2.bf16.msra.mxu0 %v861
    %1162 = vmatprep.subr.bf16.mxu0 0
    %1163 = vmatpush2.bf16.msra.mxu0 %v860
    %1164 = vmatprep.mubr.bf16.mxu0 %v48
    %1165 = vmatmul.mubr.bf16.gmra.mxu0 %v47
    %v1166 = vpop.f32.mrf.mxu0
    %v1167 = vadd.f32 %v1127, %v1166
    %v1168 = vpop.f32.mrf.mxu0
    %v1169 = vpop.f32.mrf.mxu0
    %v1170 = vpop.f32.mrf.mxu0
    %1171 = vdwg.mxu0
    %1172 = vmatprep.subr.bf16.mxu0 0
    %1173 = vmatpush1.bf16.msra.mxu0 %v875
    %1174 = vmatprep.subr.bf16.mxu0 0
    %1175 = vmatpush1.bf16.msra.mxu0 %v874
    %1176 = vmatprep.subr.bf16.mxu0 0
    %1177 = vmatpush1.bf16.msra.mxu0 %v873
    %1178 = vmatprep.subr.bf16.mxu0 0
    %1179 = vmatpush1.bf16.msra.mxu0 %v872
    %1180 = vmatprep.subr.bf16.mxu0 0
    %1181 = vmatpush1.bf16.msra.mxu0 %v871
    %1182 = vmatprep.subr.bf16.mxu0 0
    %1183 = vmatpush1.bf16.msra.mxu0 %v870
    %1184 = vmatprep.subr.bf16.mxu0 0
    %1185 = vmatpush1.bf16.msra.mxu0 %v869
    %1186 = vmatprep.subr.bf16.mxu0 0
    %1187 = vmatpush1.bf16.msra.mxu0 %v868
    %1188 = vmatprep.subr.bf16.mxu0 0
    %1189 = vmatpush2.bf16.msra.mxu0 %v883
    %1190 = vmatprep.subr.bf16.mxu0 0
    %1191 = vmatpush2.bf16.msra.mxu0 %v882
    %1192 = vmatprep.subr.bf16.mxu0 0
    %1193 = vmatpush2.bf16.msra.mxu0 %v881
    %1194 = vmatprep.subr.bf16.mxu0 0
    %1195 = vmatpush2.bf16.msra.mxu0 %v880
    %1196 = vmatprep.subr.bf16.mxu0 0
    %1197 = vmatpush2.bf16.msra.mxu0 %v879
    %1198 = vmatprep.subr.bf16.mxu0 0
    %1199 = vmatpush2.bf16.msra.mxu0 %v878
    %1200 = vmatprep.subr.bf16.mxu0 0
    %1201 = vmatpush2.bf16.msra.mxu0 %v877
    %1202 = vmatprep.subr.bf16.mxu0 0
    %1203 = vmatpush2.bf16.msra.mxu0 %v876
    %1204 = vmatprep.mubr.bf16.mxu0 %v50
    %1205 = vmatmul.mubr.bf16.gmra.mxu0 %v49
    %v1206 = vpop.f32.mrf.mxu0
    %v1207 = vadd.f32 %v1167, %v1206
    %v1208 = vpop.f32.mrf.mxu0
    %v1209 = vpop.f32.mrf.mxu0
    %v1210 = vpop.f32.mrf.mxu0
    %1211 = vdwg.mxu0
    %1212 = vmatprep.subr.bf16.mxu0 0
    %1213 = vmatpush1.bf16.msra.mxu0 %v891
    %1214 = vmatprep.subr.bf16.mxu0 0
    %1215 = vmatpush1.bf16.msra.mxu0 %v890
    %1216 = vmatprep.subr.bf16.mxu0 0
    %1217 = vmatpush1.bf16.msra.mxu0 %v889
    %1218 = vmatprep.subr.bf16.mxu0 0
    %1219 = vmatpush1.bf16.msra.mxu0 %v888
    %1220 = vmatprep.subr.bf16.mxu0 0
    %1221 = vmatpush1.bf16.msra.mxu0 %v887
    %1222 = vmatprep.subr.bf16.mxu0 0
    %1223 = vmatpush1.bf16.msra.mxu0 %v886
    %1224 = vmatprep.subr.bf16.mxu0 0
    %1225 = vmatpush1.bf16.msra.mxu0 %v885
    %1226 = vmatprep.subr.bf16.mxu0 0
    %1227 = vmatpush1.bf16.msra.mxu0 %v884
    %1228 = vmatprep.subr.bf16.mxu0 0
    %1229 = vmatpush2.bf16.msra.mxu0 %v899
    %1230 = vmatprep.subr.bf16.mxu0 0
    %1231 = vmatpush2.bf16.msra.mxu0 %v898
    %1232 = vmatprep.subr.bf16.mxu0 0
    %1233 = vmatpush2.bf16.msra.mxu0 %v897
    %1234 = vmatprep.subr.bf16.mxu0 0
    %1235 = vmatpush2.bf16.msra.mxu0 %v896
    %1236 = vmatprep.subr.bf16.mxu0 0
    %1237 = vmatpush2.bf16.msra.mxu0 %v895
    %1238 = vmatprep.subr.bf16.mxu0 0
    %1239 = vmatpush2.bf16.msra.mxu0 %v894
    %1240 = vmatprep.subr.bf16.mxu0 0
    %1241 = vmatpush2.bf16.msra.mxu0 %v893
    %1242 = vmatprep.subr.bf16.mxu0 0
    %1243 = vmatpush2.bf16.msra.mxu0 %v892
    %1244 = vmatprep.mubr.bf16.mxu0 %v52
    %1245 = vmatmul.mubr.bf16.gmra.mxu0 %v51
    %v1246 = vpop.f32.mrf.mxu0
    %v1247 = vadd.f32 %v1207, %v1246
    %v1248 = vpop.f32.mrf.mxu0
    %v1249 = vpop.f32.mrf.mxu0
    %v1250 = vpop.f32.mrf.mxu0
    %1251 = vdwg.mxu0
    %1252 = vmatprep.subr.bf16.mxu0 0
    %1253 = vmatpush1.bf16.msra.mxu0 %v907
    %1254 = vmatprep.subr.bf16.mxu0 0
    %1255 = vmatpush1.bf16.msra.mxu0 %v906
    %1256 = vmatprep.subr.bf16.mxu0 0
    %1257 = vmatpush1.bf16.msra.mxu0 %v905
    %1258 = vmatprep.subr.bf16.mxu0 0
    %1259 = vmatpush1.bf16.msra.mxu0 %v904
    %1260 = vmatprep.subr.bf16.mxu0 0
    %1261 = vmatpush1.bf16.msra.mxu0 %v903
    %1262 = vmatprep.subr.bf16.mxu0 0
    %1263 = vmatpush1.bf16.msra.mxu0 %v902
    %1264 = vmatprep.subr.bf16.mxu0 0
    %1265 = vmatpush1.bf16.msra.mxu0 %v901
    %1266 = vmatprep.subr.bf16.mxu0 0
    %1267 = vmatpush1.bf16.msra.mxu0 %v900
    %1268 = vmatprep.subr.bf16.mxu0 0
    %1269 = vmatpush2.bf16.msra.mxu0 %v915
    %1270 = vmatprep.subr.bf16.mxu0 0
    %1271 = vmatpush2.bf16.msra.mxu0 %v914
    %1272 = vmatprep.subr.bf16.mxu0 0
    %1273 = vmatpush2.bf16.msra.mxu0 %v913
    %1274 = vmatprep.subr.bf16.mxu0 0
    %1275 = vmatpush2.bf16.msra.mxu0 %v912
    %1276 = vmatprep.subr.bf16.mxu0 0
    %1277 = vmatpush2.bf16.msra.mxu0 %v911
    %1278 = vmatprep.subr.bf16.mxu0 0
    %1279 = vmatpush2.bf16.msra.mxu0 %v910
    %1280 = vmatprep.subr.bf16.mxu0 0
    %1281 = vmatpush2.bf16.msra.mxu0 %v909
    %1282 = vmatprep.subr.bf16.mxu0 0
    %1283 = vmatpush2.bf16.msra.mxu0 %v908
    %1284 = vmatprep.mubr.bf16.mxu0 %v54
    %1285 = vmatmul.mubr.bf16.gmra.mxu0 %v53
    %v1286 = vpop.f32.mrf.mxu0
    %v1287 = vadd.f32 %v1247, %v1286
    %v1288 = vpop.f32.mrf.mxu0
    %v1289 = vpop.f32.mrf.mxu0
    %v1290 = vpop.f32.mrf.mxu0
    %1291 = vdwg.mxu0
    %1292 = vmatprep.subr.bf16.mxu0 0
    %1293 = vmatpush1.bf16.msra.mxu0 %v923
    %1294 = vmatprep.subr.bf16.mxu0 0
    %1295 = vmatpush1.bf16.msra.mxu0 %v922
    %1296 = vmatprep.subr.bf16.mxu0 0
    %1297 = vmatpush1.bf16.msra.mxu0 %v921
    %1298 = vmatprep.subr.bf16.mxu0 0
    %1299 = vmatpush1.bf16.msra.mxu0 %v920
    %1300 = vmatprep.subr.bf16.mxu0 0
    %1301 = vmatpush1.bf16.msra.mxu0 %v919
    %1302 = vmatprep.subr.bf16.mxu0 0
    %1303 = vmatpush1.bf16.msra.mxu0 %v918
    %1304 = vmatprep.subr.bf16.mxu0 0
    %1305 = vmatpush1.bf16.msra.mxu0 %v917
    %1306 = vmatprep.subr.bf16.mxu0 0
    %1307 = vmatpush1.bf16.msra.mxu0 %v916
    %1308 = vmatprep.subr.bf16.mxu0 0
    %1309 = vmatpush2.bf16.msra.mxu0 %v931
    %1310 = vmatprep.subr.bf16.mxu0 0
    %1311 = vmatpush2.bf16.msra.mxu0 %v930
    %1312 = vmatprep.subr.bf16.mxu0 0
    %1313 = vmatpush2.bf16.msra.mxu0 %v929
    %1314 = vmatprep.subr.bf16.mxu0 0
    %1315 = vmatpush2.bf16.msra.mxu0 %v928
    %1316 = vmatprep.subr.bf16.mxu0 0
    %1317 = vmatpush2.bf16.msra.mxu0 %v927
    %1318 = vmatprep.subr.bf16.mxu0 0
    %1319 = vmatpush2.bf16.msra.mxu0 %v926
    %1320 = vmatprep.subr.bf16.mxu0 0
    %1321 = vmatpush2.bf16.msra.mxu0 %v925
    %1322 = vmatprep.subr.bf16.mxu0 0
    %1323 = vmatpush2.bf16.msra.mxu0 %v924
    %1324 = vmatprep.mubr.bf16.mxu0 %v56
    %1325 = vmatmul.mubr.bf16.gmra.mxu0 %v55
    %v1326 = vpop.f32.mrf.mxu0
    %v1327 = vadd.f32 %v1287, %v1326
    %v1328 = vpop.f32.mrf.mxu0
    %v1329 = vpop.f32.mrf.mxu0
    %v1330 = vpop.f32.mrf.mxu0
    %1331 = vdwg.mxu0
    %1332 = vmatprep.subr.bf16.mxu0 0
    %1333 = vmatpush1.bf16.msra.mxu0 %v939
    %1334 = vmatprep.subr.bf16.mxu0 0
    %1335 = vmatpush1.bf16.msra.mxu0 %v938
    %1336 = vmatprep.subr.bf16.mxu0 0
    %1337 = vmatpush1.bf16.msra.mxu0 %v937
    %1338 = vmatprep.subr.bf16.mxu0 0
    %1339 = vmatpush1.bf16.msra.mxu0 %v936
    %1340 = vmatprep.subr.bf16.mxu0 0
    %1341 = vmatpush1.bf16.msra.mxu0 %v935
    %1342 = vmatprep.subr.bf16.mxu0 0
    %1343 = vmatpush1.bf16.msra.mxu0 %v934
    %1344 = vmatprep.subr.bf16.mxu0 0
    %1345 = vmatpush1.bf16.msra.mxu0 %v933
    %1346 = vmatprep.subr.bf16.mxu0 0
    %1347 = vmatpush1.bf16.msra.mxu0 %v932
    %1348 = vmatprep.subr.bf16.mxu0 0
    %1349 = vmatpush2.bf16.msra.mxu0 %v947
    %1350 = vmatprep.subr.bf16.mxu0 0
    %1351 = vmatpush2.bf16.msra.mxu0 %v946
    %1352 = vmatprep.subr.bf16.mxu0 0
    %1353 = vmatpush2.bf16.msra.mxu0 %v945
    %1354 = vmatprep.subr.bf16.mxu0 0
    %1355 = vmatpush2.bf16.msra.mxu0 %v944
    %1356 = vmatprep.subr.bf16.mxu0 0
    %1357 = vmatpush2.bf16.msra.mxu0 %v943
    %1358 = vmatprep.subr.bf16.mxu0 0
    %1359 = vmatpush2.bf16.msra.mxu0 %v942
    %1360 = vmatprep.subr.bf16.mxu0 0
    %1361 = vmatpush2.bf16.msra.mxu0 %v941
    %1362 = vmatprep.subr.bf16.mxu0 0
    %1363 = vmatpush2.bf16.msra.mxu0 %v940
    %1364 = vmatprep.mubr.bf16.mxu0 %v58
    %1365 = vmatmul.mubr.bf16.gmra.mxu0 %v57
    %v1366 = vpop.f32.mrf.mxu0
    %v1367 = vadd.f32 %v1327, %v1366
    %v1368 = vpop.f32.mrf.mxu0
    %v1369 = vpop.f32.mrf.mxu0
    %v1370 = vpop.f32.mrf.mxu0
    %1371 = vdwg.mxu0
    %1372 = vmatprep.subr.bf16.mxu0 0
    %1373 = vmatpush1.bf16.msra.mxu0 %v955
    %1374 = vmatprep.subr.bf16.mxu0 0
    %1375 = vmatpush1.bf16.msra.mxu0 %v954
    %1376 = vmatprep.subr.bf16.mxu0 0
    %1377 = vmatpush1.bf16.msra.mxu0 %v953
    %1378 = vmatprep.subr.bf16.mxu0 0
    %1379 = vmatpush1.bf16.msra.mxu0 %v952
    %1380 = vmatprep.subr.bf16.mxu0 0
    %1381 = vmatpush1.bf16.msra.mxu0 %v951
    %1382 = vmatprep.subr.bf16.mxu0 0
    %1383 = vmatpush1.bf16.msra.mxu0 %v950
    %1384 = vmatprep.subr.bf16.mxu0 0
    %1385 = vmatpush1.bf16.msra.mxu0 %v949
    %1386 = vmatprep.subr.bf16.mxu0 0
    %1387 = vmatpush1.bf16.msra.mxu0 %v948
    %1388 = vmatprep.subr.bf16.mxu0 0
    %1389 = vmatpush2.bf16.msra.mxu0 %v963
    %1390 = vmatprep.subr.bf16.mxu0 0
    %1391 = vmatpush2.bf16.msra.mxu0 %v962
    %1392 = vmatprep.subr.bf16.mxu0 0
    %1393 = vmatpush2.bf16.msra.mxu0 %v961
    %1394 = vmatprep.subr.bf16.mxu0 0
    %1395 = vmatpush2.bf16.msra.mxu0 %v960
    %1396 = vmatprep.subr.bf16.mxu0 0
    %1397 = vmatpush2.bf16.msra.mxu0 %v959
    %1398 = vmatprep.subr.bf16.mxu0 0
    %1399 = vmatpush2.bf16.msra.mxu0 %v958
    %1400 = vmatprep.subr.bf16.mxu0 0
    %1401 = vmatpush2.bf16.msra.mxu0 %v957
    %1402 = vmatprep.subr.bf16.mxu0 0
    %1403 = vmatpush2.bf16.msra.mxu0 %v956
    %1404 = vmatprep.mubr.bf16.mxu0 %v60
    %1405 = vmatmul.mubr.bf16.gmra.mxu0 %v59
    %v1406 = vpop.f32.mrf.mxu0
    %v1407 = vadd.f32 %v1367, %v1406
    %v1408 = vpop.f32.mrf.mxu0
    %v1409 = vpop.f32.mrf.mxu0
    %v1410 = vpop.f32.mrf.mxu0
    %1411 = vdwg.mxu0
    %1412 = vst [vmem:[%s3] sm:$0xff] %v1407
    // Predicated region
    $region18: #{net_forward.1} parent=1 // pred_check
      _
    $region19: #{net_forward.1} parent=1 // pred_check_branch
      %1414 = sbr.rel (0) target = $region21
    $region20: #{net_forward.1} parent=1 // pred_region
      _
    $region21: #{net_forward.1} parent=1 // pred_fallthru
      _
    // Predicated region
    $region22: #{net_forward.1} parent=1 // pred_check
      _
    $region23: #{net_forward.1} parent=1 // pred_check_branch
      %1416 = sbr.rel (0) target = $region25
    $region24: #{net_forward.1} parent=1 // pred_region
      _
    $region25: #{net_forward.1} parent=1 // pred_fallthru
      _
    %1417 = vsyncpa [#allocation3], 1

</llo_original>
